<compile_context>
chip_gen: v7x
topology: tpu7x:2x2x1
jax: 0.10.0
libtpu: 0.0.40
codegen_flags: <defaults>
</compile_context>

<pallas_src>
import functools

import jax
import jax.numpy as jnp
from jax.experimental import pallas as pl
from jax.experimental.pallas import tpu as pltpu


def _dense_layer_kernel(x_ref, scale_ref, shift_ref, w_ref, mask_ref, o_ref, *, W):
    """One batch element per grid step.

    x_ref:     (1, C, H*W)  input, channel-first, spatial flattened onto lanes
    scale_ref: (C, 1)       folded BN scale = gamma / sqrt(var + eps)
    shift_ref: (C, 1)       folded BN shift = beta - mean * scale
    w_ref:     (9, G, C)    conv weight, tap-major (tap = kh*3 + kw)
    mask_ref:  (9, 1, H*W)  0/1 boundary mask per tap (padding=1 semantics)
    o_ref:     (1, G, H*W)  conv output, channel-first, lane-dense
    """
    HW = x_ref.shape[2]
    G = o_ref.shape[1]

    # BatchNorm (folded) + ReLU in f32 on the VPU.
    act = jnp.maximum(x_ref[0] * scale_ref[...] + shift_ref[...], 0.0)   # (C, HW)

    # 3x3 conv, padding=1: 9 lane-rolled taps accumulated as (G, HW) on the MXU.
    acc = jnp.zeros((G, HW), dtype=jnp.float32)
    for dh in (-1, 0, 1):
        for dw in (-1, 0, 1):
            tap = (dh + 1) * 3 + (dw + 1)
            off = dh * W + dw
            if off == 0:
                col = act                                   # center tap: no shift/mask
            else:
                # col[i] = act[i + off]  (wrap-around killed by the boundary mask)
                col = pltpu.roll(act, shift=(-off) % HW, axis=1)
                col = col * mask_ref[tap]                   # (C,HW) * (1,HW)
            acc = acc + jnp.dot(w_ref[tap], col, preferred_element_type=jnp.float32)

    o_ref[0] = acc.astype(o_ref.dtype)


@functools.partial(jax.jit, static_argnames=("eps",))
def dense_layer(x_nchw, gamma, beta, conv_w, eps=1e-5):
    """DenseLayer forward.  x_nchw: (N, C, H, W); conv_w: (G, C, 3, 3) (OIHW)."""
    N, C, H, W = x_nchw.shape
    G = conv_w.shape[0]
    HW = H * W

    # --- glue: fold training-mode BN batch statistics into per-channel scale/shift ---
    mean = jnp.mean(x_nchw, axis=(0, 2, 3))
    var = jnp.var(x_nchw, axis=(0, 2, 3))      # biased variance (matches PyTorch BN forward)
    scale = gamma / jnp.sqrt(var + eps)
    shift = beta - mean * scale

    # --- glue: free reshapes, tiny weight relayout; NO activation HBM transposes ---
    x_flat = x_nchw.reshape(N, C, HW)                                 # contiguous: bitcast
    w_tap = jnp.transpose(conv_w, (2, 3, 0, 1)).reshape(9, G, C)      # (9, G, C), 288 elems

    # Per-tap boundary masks (compile-time constants; zero-padding semantics of padding=1).
    hh = jnp.arange(H)
    ww = jnp.arange(W)
    masks = []
    for dh in (-1, 0, 1):
        for dw in (-1, 0, 1):
            mh = (hh + dh >= 0) & (hh + dh < H)
            mw = (ww + dw >= 0) & (ww + dw < W)
            masks.append((mh[:, None] & mw[None, :]).reshape(1, HW))
    mask9 = jnp.stack(masks, axis=0).astype(jnp.float32)              # (9, 1, HW)

    cost = pl.CostEstimate(
        flops=2 * N * HW * 9 * C * G,
        transcendentals=0,
        bytes_accessed=4 * (N * C * HW + 9 * G * C + 9 * HW + 2 * C + N * G * HW),
    )

    # NOTE: at larger DenseNet shapes (bigger C/H/W), re-derive the per-step block size for
    # v7x's 64 MiB VMEM (tile over rows of H); at this toy shape everything fits easily.
    out_flat = pl.pallas_call(
        functools.partial(_dense_layer_kernel, W=W),
        out_shape=jax.ShapeDtypeStruct((N, G, HW), x_nchw.dtype),
        grid_spec=pltpu.PrefetchScalarGridSpec(
            num_scalar_prefetch=0,
            grid=(N,),
            in_specs=[
                pl.BlockSpec((1, C, HW), lambda n: (n, 0, 0)),
                pl.BlockSpec((C, 1), lambda n: (0, 0)),
                pl.BlockSpec((C, 1), lambda n: (0, 0)),
                pl.BlockSpec((9, G, C), lambda n: (0, 0, 0)),
                pl.BlockSpec((9, 1, HW), lambda n: (0, 0, 0)),
            ],
            out_specs=pl.BlockSpec((1, G, HW), lambda n: (n, 0, 0)),
        ),
        compiler_params=pltpu.CompilerParams(
            dimension_semantics=("parallel",)),   # v7x: shard batch across both TensorCores
        cost_estimate=cost,
    )(x_flat, scale[:, None], shift[:, None], w_tap, mask9)

    out_nchw = out_flat.reshape(N, G, H, W)                           # bitcast
    return jnp.concatenate([x_nchw, out_nchw], axis=1)                # (N, C+G, H, W)


def _reference(x, gamma, beta, conv_w, eps=1e-5):
    mean = jnp.mean(x, axis=(0, 2, 3), keepdims=True)
    var = jnp.var(x, axis=(0, 2, 3), keepdims=True)
    act = (x - mean) / jnp.sqrt(var + eps) * gamma[None, :, None, None] \
          + beta[None, :, None, None]
    act = jnp.maximum(act, 0.0)
    out = jax.lax.conv_general_dilated(
        act, conv_w, window_strides=(1, 1), padding="SAME",
        dimension_numbers=("NCHW", "OIHW", "NCHW"))
    return jnp.concatenate([x, out], axis=1)


if __name__ == "__main__":
    N, C, H, W, G = 2, 4, 16, 16, 8   # in_channels=4, growth_rate=8

    key = jax.random.PRNGKey(0)
    kx, kg, kb, kw = jax.random.split(key, 4)
    x = jax.random.normal(kx, (N, C, H, W), dtype=jnp.float32)
    gamma = jax.random.normal(kg, (C,), dtype=jnp.float32) * 0.1 + 1.0
    beta = jax.random.normal(kb, (C,), dtype=jnp.float32) * 0.1
    conv_w = jax.random.normal(kw, (G, C, 3, 3), dtype=jnp.float32) * 0.1

    out = dense_layer(x, gamma, beta, conv_w)
    out = jax.block_until_ready(out)

    ref = _reference(x, gamma, beta, conv_w)
    assert out.shape == (N, C + G, H, W), out.shape
    assert jnp.allclose(out, ref, atol=1e-4, rtol=1e-4), \
        float(jnp.max(jnp.abs(out - ref)))

    print("KERNEL_OK")
</pallas_src>

<mosaic_0001>
module attributes {stable_mosaic.version = 11 : i64} {
  func.func @_dense_layer_kernel(%arg0: i32, %arg1: memref<1x4x256xf32, #tpu.memory_space<vmem>>, %arg2: memref<4x1xf32, #tpu.memory_space<vmem>>, %arg3: memref<4x1xf32, #tpu.memory_space<vmem>>, %arg4: memref<9x8x4xf32, #tpu.memory_space<vmem>>, %arg5: memref<9x1x256xf32, #tpu.memory_space<vmem>>, %arg6: memref<1x8x256xf32, #tpu.memory_space<vmem>>) attributes {dimension_semantics = [#tpu.dimension_semantics<parallel>], iteration_bounds = array<i64: 2>, scalar_prefetch = 0 : i64, scratch_operands = 0 : i64, tpu.core_type = #tpu.core_type<tc>, window_params = [{transform_indices = @transform_0, window_bounds = array<i64: 1, 4, 256>}, {pipeline_mode = #tpu.pipeline_mode<synchronous>, transform_indices = @transform_1, window_bounds = array<i64: 4, 1>}, {pipeline_mode = #tpu.pipeline_mode<synchronous>, transform_indices = @transform_2, window_bounds = array<i64: 4, 1>}, {pipeline_mode = #tpu.pipeline_mode<synchronous>, transform_indices = @transform_3, window_bounds = array<i64: 9, 8, 4>}, {pipeline_mode = #tpu.pipeline_mode<synchronous>, transform_indices = @transform_4, window_bounds = array<i64: 9, 1, 256>}, {transform_indices = @transform_5, window_bounds = array<i64: 1, 8, 256>}]} {
    %c0 = arith.constant 0 : index
    %c0_0 = arith.constant 0 : index
    %c0_1 = arith.constant 0 : index
    %0 = vector.load %arg1[%c0, %c0_0, %c0_1] : memref<1x4x256xf32, #tpu.memory_space<vmem>>, vector<1x4x256xf32>
    %1 = vector.shape_cast %0 : vector<1x4x256xf32> to vector<4x256xf32>
    %c0_2 = arith.constant 0 : index
    %c0_3 = arith.constant 0 : index
    %2 = vector.load %arg2[%c0_2, %c0_3] : memref<4x1xf32, #tpu.memory_space<vmem>>, vector<4x1xf32>
    %3 = vector.broadcast %2 : vector<4x1xf32> to vector<4x256xf32>
    %4 = arith.mulf %1, %3 : vector<4x256xf32>
    %c0_4 = arith.constant 0 : index
    %c0_5 = arith.constant 0 : index
    %5 = vector.load %arg3[%c0_4, %c0_5] : memref<4x1xf32, #tpu.memory_space<vmem>>, vector<4x1xf32>
    %6 = vector.broadcast %5 : vector<4x1xf32> to vector<4x256xf32>
    %7 = arith.addf %4, %6 : vector<4x256xf32>
    %cst = arith.constant 0.000000e+00 : f32
    %8 = vector.broadcast %cst : f32 to vector<4x256xf32>
    %9 = arith.maximumf %7, %8 : vector<4x256xf32>
    %cst_6 = arith.constant 0.000000e+00 : f32
    %10 = vector.broadcast %cst_6 : f32 to vector<8x256xf32>
    %c17_i32 = arith.constant 17 : i32
    %11 = tpu.dynamic_rotate %9 by %c17_i32 dim 1 : vector<4x256xf32>, i32 -> vector<4x256xf32>
    %c0_7 = arith.constant 0 : index
    %c0_8 = arith.constant 0 : index
    %c0_9 = arith.constant 0 : index
    %12 = vector.load %arg5[%c0_7, %c0_8, %c0_9] : memref<9x1x256xf32, #tpu.memory_space<vmem>>, vector<1x1x256xf32>
    %13 = vector.shape_cast %12 : vector<1x1x256xf32> to vector<1x256xf32>
    %14 = vector.broadcast %13 : vector<1x256xf32> to vector<4x256xf32>
    %15 = arith.mulf %11, %14 : vector<4x256xf32>
    %c0_10 = arith.constant 0 : index
    %c0_11 = arith.constant 0 : index
    %c0_12 = arith.constant 0 : index
    %16 = vector.load %arg4[%c0_10, %c0_11, %c0_12] : memref<9x8x4xf32, #tpu.memory_space<vmem>>, vector<1x8x4xf32>
    %17 = vector.shape_cast %16 : vector<1x8x4xf32> to vector<8x4xf32>
    %cst_13 = arith.constant dense<0.000000e+00> : vector<8x256xf32>
    %18 = tpu.matmul %17, %15, %cst_13 {dimension_numbers = #tpu.dot_dimension_numbers<[1], [0], [0], [1], [0, 0, 1, 1], [], []>} : vector<8x4xf32>, vector<4x256xf32>, vector<8x256xf32> -> vector<8x256xf32>
    %19 = arith.addf %10, %18 : vector<8x256xf32>
    %c16_i32 = arith.constant 16 : i32
    %20 = tpu.dynamic_rotate %9 by %c16_i32 dim 1 : vector<4x256xf32>, i32 -> vector<4x256xf32>
    %c1 = arith.constant 1 : index
    %c0_14 = arith.constant 0 : index
    %c0_15 = arith.constant 0 : index
    %21 = vector.load %arg5[%c1, %c0_14, %c0_15] : memref<9x1x256xf32, #tpu.memory_space<vmem>>, vector<1x1x256xf32>
    %22 = vector.shape_cast %21 : vector<1x1x256xf32> to vector<1x256xf32>
    %23 = vector.broadcast %22 : vector<1x256xf32> to vector<4x256xf32>
    %24 = arith.mulf %20, %23 : vector<4x256xf32>
    %c1_16 = arith.constant 1 : index
    %c0_17 = arith.constant 0 : index
    %c0_18 = arith.constant 0 : index
    %25 = vector.load %arg4[%c1_16, %c0_17, %c0_18] : memref<9x8x4xf32, #tpu.memory_space<vmem>>, vector<1x8x4xf32>
    %26 = vector.shape_cast %25 : vector<1x8x4xf32> to vector<8x4xf32>
    %cst_19 = arith.constant dense<0.000000e+00> : vector<8x256xf32>
    %27 = tpu.matmul %26, %24, %cst_19 {dimension_numbers = #tpu.dot_dimension_numbers<[1], [0], [0], [1], [0, 0, 1, 1], [], []>} : vector<8x4xf32>, vector<4x256xf32>, vector<8x256xf32> -> vector<8x256xf32>
    %28 = arith.addf %19, %27 : vector<8x256xf32>
    %c15_i32 = arith.constant 15 : i32
    %29 = tpu.dynamic_rotate %9 by %c15_i32 dim 1 : vector<4x256xf32>, i32 -> vector<4x256xf32>
    %c2 = arith.constant 2 : index
    %c0_20 = arith.constant 0 : index
    %c0_21 = arith.constant 0 : index
    %30 = vector.load %arg5[%c2, %c0_20, %c0_21] : memref<9x1x256xf32, #tpu.memory_space<vmem>>, vector<1x1x256xf32>
    %31 = vector.shape_cast %30 : vector<1x1x256xf32> to vector<1x256xf32>
    %32 = vector.broadcast %31 : vector<1x256xf32> to vector<4x256xf32>
    %33 = arith.mulf %29, %32 : vector<4x256xf32>
    %c2_22 = arith.constant 2 : index
    %c0_23 = arith.constant 0 : index
    %c0_24 = arith.constant 0 : index
    %34 = vector.load %arg4[%c2_22, %c0_23, %c0_24] : memref<9x8x4xf32, #tpu.memory_space<vmem>>, vector<1x8x4xf32>
    %35 = vector.shape_cast %34 : vector<1x8x4xf32> to vector<8x4xf32>
    %cst_25 = arith.constant dense<0.000000e+00> : vector<8x256xf32>
    %36 = tpu.matmul %35, %33, %cst_25 {dimension_numbers = #tpu.dot_dimension_numbers<[1], [0], [0], [1], [0, 0, 1, 1], [], []>} : vector<8x4xf32>, vector<4x256xf32>, vector<8x256xf32> -> vector<8x256xf32>
    %37 = arith.addf %28, %36 : vector<8x256xf32>
    %c1_i32 = arith.constant 1 : i32
    %38 = tpu.dynamic_rotate %9 by %c1_i32 dim 1 : vector<4x256xf32>, i32 -> vector<4x256xf32>
    %c3 = arith.constant 3 : index
    %c0_26 = arith.constant 0 : index
    %c0_27 = arith.constant 0 : index
    %39 = vector.load %arg5[%c3, %c0_26, %c0_27] : memref<9x1x256xf32, #tpu.memory_space<vmem>>, vector<1x1x256xf32>
    %40 = vector.shape_cast %39 : vector<1x1x256xf32> to vector<1x256xf32>
    %41 = vector.broadcast %40 : vector<1x256xf32> to vector<4x256xf32>
    %42 = arith.mulf %38, %41 : vector<4x256xf32>
    %c3_28 = arith.constant 3 : index
    %c0_29 = arith.constant 0 : index
    %c0_30 = arith.constant 0 : index
    %43 = vector.load %arg4[%c3_28, %c0_29, %c0_30] : memref<9x8x4xf32, #tpu.memory_space<vmem>>, vector<1x8x4xf32>
    %44 = vector.shape_cast %43 : vector<1x8x4xf32> to vector<8x4xf32>
    %cst_31 = arith.constant dense<0.000000e+00> : vector<8x256xf32>
    %45 = tpu.matmul %44, %42, %cst_31 {dimension_numbers = #tpu.dot_dimension_numbers<[1], [0], [0], [1], [0, 0, 1, 1], [], []>} : vector<8x4xf32>, vector<4x256xf32>, vector<8x256xf32> -> vector<8x256xf32>
    %46 = arith.addf %37, %45 : vector<8x256xf32>
    %c4 = arith.constant 4 : index
    %c0_32 = arith.constant 0 : index
    %c0_33 = arith.constant 0 : index
    %47 = vector.load %arg4[%c4, %c0_32, %c0_33] : memref<9x8x4xf32, #tpu.memory_space<vmem>>, vector<1x8x4xf32>
    %48 = vector.shape_cast %47 : vector<1x8x4xf32> to vector<8x4xf32>
    %cst_34 = arith.constant dense<0.000000e+00> : vector<8x256xf32>
    %49 = tpu.matmul %48, %9, %cst_34 {dimension_numbers = #tpu.dot_dimension_numbers<[1], [0], [0], [1], [0, 0, 1, 1], [], []>} : vector<8x4xf32>, vector<4x256xf32>, vector<8x256xf32> -> vector<8x256xf32>
    %50 = arith.addf %46, %49 : vector<8x256xf32>
    %c255_i32 = arith.constant 255 : i32
    %51 = tpu.dynamic_rotate %9 by %c255_i32 dim 1 : vector<4x256xf32>, i32 -> vector<4x256xf32>
    %c5 = arith.constant 5 : index
    %c0_35 = arith.constant 0 : index
    %c0_36 = arith.constant 0 : index
    %52 = vector.load %arg5[%c5, %c0_35, %c0_36] : memref<9x1x256xf32, #tpu.memory_space<vmem>>, vector<1x1x256xf32>
    %53 = vector.shape_cast %52 : vector<1x1x256xf32> to vector<1x256xf32>
    %54 = vector.broadcast %53 : vector<1x256xf32> to vector<4x256xf32>
    %55 = arith.mulf %51, %54 : vector<4x256xf32>
    %c5_37 = arith.constant 5 : index
    %c0_38 = arith.constant 0 : index
    %c0_39 = arith.constant 0 : index
    %56 = vector.load %arg4[%c5_37, %c0_38, %c0_39] : memref<9x8x4xf32, #tpu.memory_space<vmem>>, vector<1x8x4xf32>
    %57 = vector.shape_cast %56 : vector<1x8x4xf32> to vector<8x4xf32>
    %cst_40 = arith.constant dense<0.000000e+00> : vector<8x256xf32>
    %58 = tpu.matmul %57, %55, %cst_40 {dimension_numbers = #tpu.dot_dimension_numbers<[1], [0], [0], [1], [0, 0, 1, 1], [], []>} : vector<8x4xf32>, vector<4x256xf32>, vector<8x256xf32> -> vector<8x256xf32>
    %59 = arith.addf %50, %58 : vector<8x256xf32>
    %c241_i32 = arith.constant 241 : i32
    %60 = tpu.dynamic_rotate %9 by %c241_i32 dim 1 : vector<4x256xf32>, i32 -> vector<4x256xf32>
    %c6 = arith.constant 6 : index
    %c0_41 = arith.constant 0 : index
    %c0_42 = arith.constant 0 : index
    %61 = vector.load %arg5[%c6, %c0_41, %c0_42] : memref<9x1x256xf32, #tpu.memory_space<vmem>>, vector<1x1x256xf32>
    %62 = vector.shape_cast %61 : vector<1x1x256xf32> to vector<1x256xf32>
    %63 = vector.broadcast %62 : vector<1x256xf32> to vector<4x256xf32>
    %64 = arith.mulf %60, %63 : vector<4x256xf32>
    %c6_43 = arith.constant 6 : index
    %c0_44 = arith.constant 0 : index
    %c0_45 = arith.constant 0 : index
    %65 = vector.load %arg4[%c6_43, %c0_44, %c0_45] : memref<9x8x4xf32, #tpu.memory_space<vmem>>, vector<1x8x4xf32>
    %66 = vector.shape_cast %65 : vector<1x8x4xf32> to vector<8x4xf32>
    %cst_46 = arith.constant dense<0.000000e+00> : vector<8x256xf32>
    %67 = tpu.matmul %66, %64, %cst_46 {dimension_numbers = #tpu.dot_dimension_numbers<[1], [0], [0], [1], [0, 0, 1, 1], [], []>} : vector<8x4xf32>, vector<4x256xf32>, vector<8x256xf32> -> vector<8x256xf32>
    %68 = arith.addf %59, %67 : vector<8x256xf32>
    %c240_i32 = arith.constant 240 : i32
    %69 = tpu.dynamic_rotate %9 by %c240_i32 dim 1 : vector<4x256xf32>, i32 -> vector<4x256xf32>
    %c7 = arith.constant 7 : index
    %c0_47 = arith.constant 0 : index
    %c0_48 = arith.constant 0 : index
    %70 = vector.load %arg5[%c7, %c0_47, %c0_48] : memref<9x1x256xf32, #tpu.memory_space<vmem>>, vector<1x1x256xf32>
    %71 = vector.shape_cast %70 : vector<1x1x256xf32> to vector<1x256xf32>
    %72 = vector.broadcast %71 : vector<1x256xf32> to vector<4x256xf32>
    %73 = arith.mulf %69, %72 : vector<4x256xf32>
    %c7_49 = arith.constant 7 : index
    %c0_50 = arith.constant 0 : index
    %c0_51 = arith.constant 0 : index
    %74 = vector.load %arg4[%c7_49, %c0_50, %c0_51] : memref<9x8x4xf32, #tpu.memory_space<vmem>>, vector<1x8x4xf32>
    %75 = vector.shape_cast %74 : vector<1x8x4xf32> to vector<8x4xf32>
    %cst_52 = arith.constant dense<0.000000e+00> : vector<8x256xf32>
    %76 = tpu.matmul %75, %73, %cst_52 {dimension_numbers = #tpu.dot_dimension_numbers<[1], [0], [0], [1], [0, 0, 1, 1], [], []>} : vector<8x4xf32>, vector<4x256xf32>, vector<8x256xf32> -> vector<8x256xf32>
    %77 = arith.addf %68, %76 : vector<8x256xf32>
    %c239_i32 = arith.constant 239 : i32
    %78 = tpu.dynamic_rotate %9 by %c239_i32 dim 1 : vector<4x256xf32>, i32 -> vector<4x256xf32>
    %c8 = arith.constant 8 : index
    %c0_53 = arith.constant 0 : index
    %c0_54 = arith.constant 0 : index
    %79 = vector.load %arg5[%c8, %c0_53, %c0_54] : memref<9x1x256xf32, #tpu.memory_space<vmem>>, vector<1x1x256xf32>
    %80 = vector.shape_cast %79 : vector<1x1x256xf32> to vector<1x256xf32>
    %81 = vector.broadcast %80 : vector<1x256xf32> to vector<4x256xf32>
    %82 = arith.mulf %78, %81 : vector<4x256xf32>
    %c8_55 = arith.constant 8 : index
    %c0_56 = arith.constant 0 : index
    %c0_57 = arith.constant 0 : index
    %83 = vector.load %arg4[%c8_55, %c0_56, %c0_57] : memref<9x8x4xf32, #tpu.memory_space<vmem>>, vector<1x8x4xf32>
    %84 = vector.shape_cast %83 : vector<1x8x4xf32> to vector<8x4xf32>
    %cst_58 = arith.constant dense<0.000000e+00> : vector<8x256xf32>
    %85 = tpu.matmul %84, %82, %cst_58 {dimension_numbers = #tpu.dot_dimension_numbers<[1], [0], [0], [1], [0, 0, 1, 1], [], []>} : vector<8x4xf32>, vector<4x256xf32>, vector<8x256xf32> -> vector<8x256xf32>
    %86 = arith.addf %77, %85 : vector<8x256xf32>
    %c0_59 = arith.constant 0 : index
    %c0_60 = arith.constant 0 : index
    %c0_61 = arith.constant 0 : index
    %87 = vector.load %arg6[%c0_59, %c0_60, %c0_61] : memref<1x8x256xf32, #tpu.memory_space<vmem>>, vector<1x8x256xf32>
    %88 = vector.shape_cast %87 : vector<1x8x256xf32> to vector<8x256xf32>
    %89 = vector.shape_cast %86 : vector<8x256xf32> to vector<1x8x256xf32>
    tpu.vector_store %arg6[%c0_59, %c0_60, %c0_61], %89 {strides = array<i32>} : memref<1x8x256xf32, #tpu.memory_space<vmem>>, vector<1x8x256xf32>,
    return
  }
  func.func @transform_0(%arg0: i32) -> (i32, i32, i32) {
    %c0_i32 = arith.constant 0 : i32
    %c0_i32_0 = arith.constant 0 : i32
    %c0_i32_1 = arith.constant 0 : i32
    return %arg0, %c0_i32, %c0_i32_0 : i32, i32, i32
  }
  func.func @transform_1(%arg0: i32) -> (i32, i32) {
    %c0_i32 = arith.constant 0 : i32
    %c0_i32_0 = arith.constant 0 : i32
    %c0_i32_1 = arith.constant 0 : i32
    return %c0_i32, %c0_i32_0 : i32, i32
  }
  func.func @transform_2(%arg0: i32) -> (i32, i32) {
    %c0_i32 = arith.constant 0 : i32
    %c0_i32_0 = arith.constant 0 : i32
    %c0_i32_1 = arith.constant 0 : i32
    return %c0_i32, %c0_i32_0 : i32, i32
  }
  func.func @transform_3(%arg0: i32) -> (i32, i32, i32) {
    %c0_i32 = arith.constant 0 : i32
    %c0_i32_0 = arith.constant 0 : i32
    %c0_i32_1 = arith.constant 0 : i32
    %c0_i32_2 = arith.constant 0 : i32
    return %c0_i32, %c0_i32_0, %c0_i32_1 : i32, i32, i32
  }
  func.func @transform_4(%arg0: i32) -> (i32, i32, i32) {
    %c0_i32 = arith.constant 0 : i32
    %c0_i32_0 = arith.constant 0 : i32
    %c0_i32_1 = arith.constant 0 : i32
    %c0_i32_2 = arith.constant 0 : i32
    return %c0_i32, %c0_i32_0, %c0_i32_1 : i32, i32, i32
  }
  func.func @transform_5(%arg0: i32) -> (i32, i32, i32) {
    %c0_i32 = arith.constant 0 : i32
    %c0_i32_0 = arith.constant 0 : i32
    %c0_i32_1 = arith.constant 0 : i32
    return %arg0, %c0_i32, %c0_i32_0 : i32, i32, i32
  }
}

</mosaic_0001>

<llo_original>
// kernel: dense_layer.1
$region0: #{dense_layer.1}
  #allocation0 [shape = 'u32[]', space=smem, size = 0x4, offset = 0x4, fixed_abs, tag = 'smem constant byte address 0x4 - core index']
  #allocation1 [shape = 'u32[144,128]{1,0:T(1,128)}', space=vmem, size = 0x12000, scoped, tag = 'internal scratch']
  %s0 = inlined_call_operand.vmem [shape: f32[2,4,256], index: 0, kind: input, shape index: {}]
  %s1 = inlined_call_operand.vmem [shape: f32[4,1], index: 1, kind: input, shape index: {}]
  %s2 = inlined_call_operand.vmem [shape: f32[4,1], index: 2, kind: input, shape index: {}]
  %s3 = inlined_call_operand.vmem [shape: f32[9,8,4], index: 3, kind: input, shape index: {}]
  %s4 = inlined_call_operand.vmem [shape: f32[9,1,256], index: 4, kind: input, shape index: {}]
  %s5 = inlined_call_operand.vmem [shape: f32[2,8,256], index: 5, kind: output, shape index: {}]
  %s6 = sld [smem:[#allocation0]]
  $region53: #{dense_layer.1} parent=0
    _
  %s8 = ssub.s32 1, %s6
  %s9 = scalar_select 0, %s8, %s6
  loop: start=0, step=1, limit=4
  $region2: #{dense_layer.1} parent=0 // loop_pre_header
    _
  $region3: #{dense_layer.1} parent=0 // loop_header
    %s11 = sphi 0, %s15
    %p12 = scmp.ge.s32.totalorder %s11, 4
    %s21 = sphi 0, %s23
    %s24 = sphi 0, %s21
    %s25 = sphi 0, %s24
    %s41 = sphi 0, %s25
    %s45 = sphi 0, %s45
    %s47 = sphi 0, %s45
    %s48 = sphi 0, %s47
    %s62 = sphi 0, %s48
    %s66 = sphi 0, %s66
    %s68 = sphi 0, %s66
    %s69 = sphi 0, %s68
    %s83 = sphi 0, %s69
    %s87 = sphi 0, %s87
    %s89 = sphi 0, %s87
    %s90 = sphi 0, %s89
    %s104 = sphi 0, %s90
    %s108 = sphi 0, %s108
    %s110 = sphi 0, %s108
    %s111 = sphi 0, %s110
    %s125 = sphi 0, %s111
    %s131 = sphi 0, %s133
    %s134 = sphi 0, %s131
    %s135 = sphi 0, %s134
    %s151 = sphi 0, %s135
  $region4: #{dense_layer.1} parent=0 // loop_header_branch
    %14 = sbr.rel (%p12) target = $region8
  $region5: #{dense_layer.1} parent=0 // loop_body
    %s16 = ssub.s32 %s11, 1
    %s17 = ssub.s32 %s11, 2
    %s18 = sadd.s32 %s11, 1
    %s19 = ssub.s32 %s11, %s18
    %p20 = scmp.eq.s32.totalorder %s19, 0
    %s22 = sadd.s32 %s21, 1
    %s23 = scalar_select %p20, %s21, %s22
    %p26 = pneg %p20
    %p27 = scmp.eq.s32.totalorder %s11, 1
    %p28 = por %p26, %p27
    %p29 = scmp.ne.s32.totalorder %s21, %s24
    %p30 = scmp.eq.s32.totalorder %s11, 0
    %p31 = por %p29, %p30
    %p32 = scmp.ne.s32.totalorder %s21, %s24
    %p33 = scmp.eq.s32.totalorder %s16, 1
    %p34 = por %p32, %p33
    %p35 = scmp.ne.s32.totalorder %s24, %s25
    %p36 = scmp.eq.s32.totalorder %s16, 0
    %p37 = por %p35, %p36
    %p38 = scmp.ne.s32.totalorder %s24, %s25
    %p39 = scmp.eq.s32.totalorder %s17, 1
    %p40 = por %p38, %p39
    %p42 = scmp.ne.s32.totalorder %s25, %s41
    %p43 = scmp.eq.s32.totalorder %s17, 0
    %p44 = por %p42, %p43
    %s46 = sadd.s32 %s45, 1
    %p49 = scmp.eq.s32.totalorder %s11, 1
    %p50 = scmp.ne.s32.totalorder %s45, %s47
    %p51 = scmp.eq.s32.totalorder %s11, 0
    %p52 = por %p50, %p51
    %p53 = scmp.ne.s32.totalorder %s45, %s47
    %p54 = scmp.eq.s32.totalorder %s16, 1
    %p55 = por %p53, %p54
    %p56 = scmp.ne.s32.totalorder %s47, %s48
    %p57 = scmp.eq.s32.totalorder %s16, 0
    %p58 = por %p56, %p57
    %p59 = scmp.ne.s32.totalorder %s47, %s48
    %p60 = scmp.eq.s32.totalorder %s17, 1
    %p61 = por %p59, %p60
    %p63 = scmp.ne.s32.totalorder %s48, %s62
    %p64 = scmp.eq.s32.totalorder %s17, 0
    %p65 = por %p63, %p64
    %s67 = sadd.s32 %s66, 1
    %p70 = scmp.eq.s32.totalorder %s11, 1
    %p71 = scmp.ne.s32.totalorder %s66, %s68
    %p72 = scmp.eq.s32.totalorder %s11, 0
    %p73 = por %p71, %p72
    %p74 = scmp.ne.s32.totalorder %s66, %s68
    %p75 = scmp.eq.s32.totalorder %s16, 1
    %p76 = por %p74, %p75
    %p77 = scmp.ne.s32.totalorder %s68, %s69
    %p78 = scmp.eq.s32.totalorder %s16, 0
    %p79 = por %p77, %p78
    %p80 = scmp.ne.s32.totalorder %s68, %s69
    %p81 = scmp.eq.s32.totalorder %s17, 1
    %p82 = por %p80, %p81
    %p84 = scmp.ne.s32.totalorder %s69, %s83
    %p85 = scmp.eq.s32.totalorder %s17, 0
    %p86 = por %p84, %p85
    %s88 = sadd.s32 %s87, 1
    %p91 = scmp.eq.s32.totalorder %s11, 1
    %p92 = scmp.ne.s32.totalorder %s87, %s89
    %p93 = scmp.eq.s32.totalorder %s11, 0
    %p94 = por %p92, %p93
    %p95 = scmp.ne.s32.totalorder %s87, %s89
    %p96 = scmp.eq.s32.totalorder %s16, 1
    %p97 = por %p95, %p96
    %p98 = scmp.ne.s32.totalorder %s89, %s90
    %p99 = scmp.eq.s32.totalorder %s16, 0
    %p100 = por %p98, %p99
    %p101 = scmp.ne.s32.totalorder %s89, %s90
    %p102 = scmp.eq.s32.totalorder %s17, 1
    %p103 = por %p101, %p102
    %p105 = scmp.ne.s32.totalorder %s90, %s104
    %p106 = scmp.eq.s32.totalorder %s17, 0
    %p107 = por %p105, %p106
    %s109 = sadd.s32 %s108, 1
    %p112 = scmp.eq.s32.totalorder %s11, 1
    %p113 = scmp.ne.s32.totalorder %s108, %s110
    %p114 = scmp.eq.s32.totalorder %s11, 0
    %p115 = por %p113, %p114
    %p116 = scmp.ne.s32.totalorder %s108, %s110
    %p117 = scmp.eq.s32.totalorder %s16, 1
    %p118 = por %p116, %p117
    %p119 = scmp.ne.s32.totalorder %s110, %s111
    %p120 = scmp.eq.s32.totalorder %s16, 0
    %p121 = por %p119, %p120
    %p122 = scmp.ne.s32.totalorder %s110, %s111
    %p123 = scmp.eq.s32.totalorder %s17, 1
    %p124 = por %p122, %p123
    %p126 = scmp.ne.s32.totalorder %s111, %s125
    %p127 = scmp.eq.s32.totalorder %s17, 0
    %p128 = por %p126, %p127
    %s129 = ssub.s32 %s11, %s18
    %p130 = scmp.eq.s32.totalorder %s129, 0
    %s132 = sadd.s32 %s131, 1
    %s133 = scalar_select %p130, %s131, %s132
    %p136 = pneg %p130
    %p137 = scmp.eq.s32.totalorder %s11, 1
    %p138 = por %p136, %p137
    %p139 = scmp.ne.s32.totalorder %s131, %s134
    %p140 = scmp.eq.s32.totalorder %s11, 0
    %p141 = por %p139, %p140
    %p142 = scmp.ne.s32.totalorder %s131, %s134
    %p143 = scmp.eq.s32.totalorder %s16, 1
    %p144 = por %p142, %p143
    %p145 = scmp.ne.s32.totalorder %s134, %s135
    %p146 = scmp.eq.s32.totalorder %s16, 0
    %p147 = por %p145, %p146
    %p148 = scmp.ne.s32.totalorder %s134, %s135
    %p149 = scmp.eq.s32.totalorder %s17, 1
    %p150 = por %p148, %p149
    %p152 = scmp.ne.s32.totalorder %s135, %s151
    %p153 = scmp.eq.s32.totalorder %s17, 0
    %p154 = por %p152, %p153
    %p155 = scmp.le.s32.totalorder 1, %s11
    %p156 = scmp.lt.s32.totalorder %s11, 3
    %p157 = pnand %p155, %p156
    %p158 = pneg %p157
    // Predicated region
    $region9: #{dense_layer.1} parent=5 // pred_check
      _
    $region10: #{dense_layer.1} parent=5 // pred_check_branch
      %160 = sbr.rel (%p157) target = $region12
    $region11: #{dense_layer.1} parent=5 // pred_region
      %s161 = ssub.s32 %s11, 1
      // Predicated region
      $region13: #{dense_layer.1} parent=11 // pred_check
        %p162 = pneg %p58
      $region14: #{dense_layer.1} parent=11 // pred_check_branch
        %164 = sbr.rel (%p162) target = $region16
      $region15: #{dense_layer.1} parent=11 // pred_region
        _
      $region16: #{dense_layer.1} parent=11 // pred_fallthru
        _
      // Predicated region
      $region17: #{dense_layer.1} parent=11 // pred_check
        %p165 = pneg %p79
      $region18: #{dense_layer.1} parent=11 // pred_check_branch
        %167 = sbr.rel (%p165) target = $region20
      $region19: #{dense_layer.1} parent=11 // pred_region
        _
      $region20: #{dense_layer.1} parent=11 // pred_fallthru
        _
      // Predicated region
      $region21: #{dense_layer.1} parent=11 // pred_check
        %p168 = pneg %p100
      $region22: #{dense_layer.1} parent=11 // pred_check_branch
        %170 = sbr.rel (%p168) target = $region24
      $region23: #{dense_layer.1} parent=11 // pred_region
        _
      $region24: #{dense_layer.1} parent=11 // pred_fallthru
        _
      // Predicated region
      $region25: #{dense_layer.1} parent=11 // pred_check
        %p171 = pneg %p121
      $region26: #{dense_layer.1} parent=11 // pred_check_branch
        %173 = sbr.rel (%p171) target = $region28
      $region27: #{dense_layer.1} parent=11 // pred_region
        _
      $region28: #{dense_layer.1} parent=11 // pred_fallthru
        _
    $region12: #{dense_layer.1} parent=5 // pred_fallthru
      _
    %p174 = scmp.lt.s32.totalorder %s11, 2
    // Predicated region
    $region29: #{dense_layer.1} parent=5 // pred_check
      %p175 = pneg %p174
    $region30: #{dense_layer.1} parent=5 // pred_check_branch
      %177 = sbr.rel (%p175) target = $region32
    $region31: #{dense_layer.1} parent=5 // pred_region
      // Predicated region
      $region33: #{dense_layer.1} parent=31 // pred_check
        %p178 = pneg %p31
      $region34: #{dense_layer.1} parent=31 // pred_check_branch
        %180 = sbr.rel (%p178) target = $region36
      $region35: #{dense_layer.1} parent=31 // pred_region
        %p181 = scmp.lt.s32.totalorder %s11, 1
        %s182 = scalar_select %p181, %s11, 1
        %s183 = smul.addr %s182, 2
        %s184 = smul.addr %s183, 4
        %s185 = scalar_lea.vmem %s0, %s184
      $region36: #{dense_layer.1} parent=31 // pred_fallthru
        _
    $region32: #{dense_layer.1} parent=5 // pred_fallthru
      _
    %p186 = scmp.le.s32.totalorder 1, %s11
    %p187 = scmp.lt.s32.totalorder %s11, 3
    %p188 = pnand %p186, %p187
    %p189 = pneg %p188
    // Predicated region
    $region37: #{dense_layer.1} parent=5 // pred_check
      _
    $region38: #{dense_layer.1} parent=5 // pred_check_branch
      %191 = sbr.rel (%p188) target = $region40
    $region39: #{dense_layer.1} parent=5 // pred_region
      %s192 = ssub.s32 %s11, 1
      %p193 = scmp.lt.s32.totalorder %s16, 1
      %s194 = scalar_select %p193, %s16, 1
      %s195 = smul.addr %s194, 2
      %s196 = smul.addr %s195, 4
      %s197 = scalar_lea.vmem %s0, %s196
      %p198 = pneg %p37
      %p199 = pneg %p34
      %p200 = pneg %p58
      %p201 = pneg %p55
      %p202 = pneg %p79
      %p203 = pneg %p76
      %p204 = pneg %p100
      %p205 = pneg %p97
      %p206 = pneg %p121
      %p207 = pneg %p118
      %p208 = pneg %p147
      %p209 = pneg %p144
      %p210 = scmp.lt.s32.totalorder %s16, 1
      %s211 = scalar_select %p210, %s16, 1
      %s212 = smul.addr %s211, 2
      %s213 = smul.addr %s212, 8
      %s214 = scalar_lea.vmem %s5, %s213
      %p215 = scmp.lt.s32.totalorder %s16, 1
      %s216 = scalar_select %p215, %s16, 1
      %s217 = smul.addr %s216, 2
      %s218 = smul.addr %s217, 4
      %s219 = scalar_lea.vmem %s0, %s218
      %p220 = scmp.lt.s32.totalorder %s16, 1
      %s221 = scalar_select %p220, %s16, 1
      %s222 = smul.addr %s221, 2
      %s223 = smul.addr %s222, 8
      %s224 = scalar_lea.vmem %s5, %s223
      %v225 = vld [vmem:[%s219] sm:$0xff]
      %v226 = vld [vmem:[%s1] sm:$0xf]
      %228 = vset.pattern.permute.xlu0 0
      %229 = vperm.xlu0 %228, %v226
      %v230 = vpop.permute.xlu0 %229
      %v232 = vunpack.c.l.s4 839922192
      %v233 = vunpack.c.0.s8 %v232
      %v234 = vlaneseq
      %v235 = vshrl.u32 %v234, 7
      %v236 = vsub.s32 %v233, %v235
      %v237 = vrot.slane %v230, %v236
      %v239 = vmul.f32 %v225, %v237
      %v240 = vld [vmem:[%s2] sm:$0xf]
      %242 = vset.pattern.permute.xlu0 0
      %243 = vperm.xlu0 %242, %v240
      %v244 = vpop.permute.xlu0 %243
      %v246 = vunpack.c.l.s4 839922192
      %v247 = vunpack.c.0.s8 %v246
      %v248 = vlaneseq
      %v249 = vshrl.u32 %v248, 7
      %v250 = vsub.s32 %v247, %v249
      %v251 = vrot.slane %v244, %v250
      %v253 = vadd.f32 %v239, %v251
      %v254 = vmax.f32 %v253, 0.0
      %v256 = vcombine.high %v254, %v254
      %258 = vrot.lane.b32.xlu0 %v254, 17
      %v259 = vpop.permute.xlu0 %258
      %260 = vrot.lane.b32.xlu0 %v256, 17
      %v261 = vpop.permute.xlu0 %260
      %v262 = vlaneseq
      %v263 = vand.u32 %v262, 127
      %vm264 = vcmp.lt.s32.totalorder %v263, 17
      %v265 = vsel %vm264, %v259, %v261
      %v266 = vsel %vm264, %v261, %v259
      %v267 = vld [vmem:[%s4] sm:$0x3]
      %v269 = vlaneseq
      %v270 = vshrl.u32 %v269, 7
      %v271 = vsub.s32 0, %v270
      %v272 = vrot.slane %v267, %v271
      %v273 = vlaneseq
      %v274 = vshrl.u32 %v273, 7
      %v275 = vsub.s32 1, %v274
      %v276 = vrot.slane %v267, %v275
      %v279 = vmul.f32 %v266, %v272
      %v280 = vmul.f32 %v265, %v276
      %v281 = vld [vmem:[%s3] sm:$0xff]
      %282 = vrot.lane.b32.xlu0 %v254, 16
      %v283 = vpop.permute.xlu0 %282
      %284 = vrot.lane.b32.xlu0 %v256, 16
      %v285 = vpop.permute.xlu0 %284
      %vm286 = vcmp.lt.s32.totalorder %v263, 16
      %v287 = vsel %vm286, %v283, %v285
      %v288 = vsel %vm286, %v285, %v283
      %s289 = scalar_lea.vmem %s4, 2
      %v290 = vld [vmem:[%s289] sm:$0x3]
      %v292 = vlaneseq
      %v293 = vshrl.u32 %v292, 7
      %v294 = vsub.s32 0, %v293
      %v295 = vrot.slane %v290, %v294
      %v296 = vlaneseq
      %v297 = vshrl.u32 %v296, 7
      %v298 = vsub.s32 1, %v297
      %v299 = vrot.slane %v290, %v298
      %v302 = vmul.f32 %v288, %v295
      %v303 = vmul.f32 %v287, %v299
      %s304 = scalar_lea.vmem %s3, 8
      %v305 = vld [vmem:[%s304] sm:$0xff]
      %vm306 = vcmask 31744
      %v308 = vsel %vm306, %v305, 0
      %vm310 = vcmask 1043456
      %v312 = vsel %vm310, %v302, 0
      %v315 = vsel %vm310, %v303, 0
      %317 = vmatprep.subr.mxu0 %v315
      %318 = vmatpush1.msra.mxu0 %v312
      %319 = vmatprep.subr.mxu0 0.0
      %320 = vmatpush1.msra.mxu0 0.0
      %321 = vmatprep.subr.mxu0 0.0
      %322 = vmatpush1.msra.mxu0 0.0
      %323 = vmatprep.subr.mxu0 0.0
      %324 = vmatpush1.msra.mxu0 0.0
      %325 = vmatprep.subr.mxu0 0.0
      %326 = vmatpush1.msra.mxu0 0.0
      %327 = vmatprep.subr.mxu0 0.0
      %328 = vmatpush1.msra.mxu0 0.0
      %329 = vmatprep.subr.mxu0 0.0
      %330 = vmatpush1.msra.mxu0 0.0
      %331 = vmatprep.subr.mxu0 0.0
      %332 = vmatpush1.msra.mxu0 0.0
      %333 = vmatprep.subr.mxu0 0.0
      %334 = vmatpush1.msra.mxu0 0.0
      %335 = vmatprep.subr.mxu0 0.0
      %336 = vmatpush1.msra.mxu0 0.0
      %337 = vmatprep.subr.mxu0 0.0
      %338 = vmatpush1.msra.mxu0 0.0
      %339 = vmatprep.subr.mxu0 0.0
      %340 = vmatpush1.msra.mxu0 0.0
      %341 = vmatprep.subr.mxu0 0.0
      %342 = vmatpush1.msra.mxu0 0.0
      %343 = vmatprep.subr.mxu0 0.0
      %344 = vmatpush1.msra.mxu0 0.0
      %345 = vmatprep.subr.mxu0 0.0
      %346 = vmatpush1.msra.mxu0 0.0
      %347 = vmatprep.subr.mxu0 0.0
      %348 = vmatpush1.msra.mxu0 0.0
      %349 = vmatprep.subr.mxu0 0.0
      %350 = vmatpush1.msra.mxu0 0.0
      %351 = vmatprep.subr.mxu0 0.0
      %352 = vmatpush1.msra.mxu0 0.0
      %353 = vmatprep.subr.mxu0 0.0
      %354 = vmatpush1.msra.mxu0 0.0
      %355 = vmatprep.subr.mxu0 0.0
      %356 = vmatpush1.msra.mxu0 0.0
      %357 = vmatprep.subr.mxu0 0.0
      %358 = vmatpush1.msra.mxu0 0.0
      %359 = vmatprep.subr.mxu0 0.0
      %360 = vmatpush1.msra.mxu0 0.0
      %361 = vmatprep.subr.mxu0 0.0
      %362 = vmatpush1.msra.mxu0 0.0
      %363 = vmatprep.subr.mxu0 0.0
      %364 = vmatpush1.msra.mxu0 0.0
      %365 = vmatprep.subr.mxu0 0.0
      %366 = vmatpush1.msra.mxu0 0.0
      %367 = vmatprep.subr.mxu0 0.0
      %368 = vmatpush1.msra.mxu0 0.0
      %369 = vmatprep.subr.mxu0 0.0
      %370 = vmatpush1.msra.mxu0 0.0
      %371 = vmatprep.subr.mxu0 0.0
      %372 = vmatpush1.msra.mxu0 0.0
      %373 = vmatprep.subr.mxu0 0.0
      %374 = vmatpush1.msra.mxu0 0.0
      %375 = vmatprep.subr.mxu0 0.0
      %376 = vmatpush1.msra.mxu0 0.0
      %377 = vmatprep.subr.mxu0 0.0
      %378 = vmatpush1.msra.mxu0 0.0
      %379 = vmatprep.subr.mxu0 0.0
      %380 = vmatpush1.msra.mxu0 0.0
      %381 = vmatprep.mubr.f32.mxu0 0.0
      %382 = vmatmul.mubr.f32.gmra.mrb[0].mxu0 %v308
      %v383 = vpop.f32.mrb[0].mxu0
      %v384 = vadd.f32 0.0, %v383
      %v385 = vpop.f32.mrb[0].mxu0
      %v386 = vadd.f32 0.0, %v385
      %387 = vdwg.mxu0
      %v389 = vsel %vm306, %v281, 0
      %v392 = vsel %vm310, %v279, 0
      %v395 = vsel %vm310, %v280, 0
      %397 = vmatprep.subr.mxu0 %v395
      %398 = vmatpush1.msra.mxu0 %v392
      %399 = vmatprep.subr.mxu0 0.0
      %400 = vmatpush1.msra.mxu0 0.0
      %401 = vmatprep.subr.mxu0 0.0
      %402 = vmatpush1.msra.mxu0 0.0
      %403 = vmatprep.subr.mxu0 0.0
      %404 = vmatpush1.msra.mxu0 0.0
      %405 = vmatprep.subr.mxu0 0.0
      %406 = vmatpush1.msra.mxu0 0.0
      %407 = vmatprep.subr.mxu0 0.0
      %408 = vmatpush1.msra.mxu0 0.0
      %409 = vmatprep.subr.mxu0 0.0
      %410 = vmatpush1.msra.mxu0 0.0
      %411 = vmatprep.subr.mxu0 0.0
      %412 = vmatpush1.msra.mxu0 0.0
      %413 = vmatprep.subr.mxu0 0.0
      %414 = vmatpush1.msra.mxu0 0.0
      %415 = vmatprep.subr.mxu0 0.0
      %416 = vmatpush1.msra.mxu0 0.0
      %417 = vmatprep.subr.mxu0 0.0
      %418 = vmatpush1.msra.mxu0 0.0
      %419 = vmatprep.subr.mxu0 0.0
      %420 = vmatpush1.msra.mxu0 0.0
      %421 = vmatprep.subr.mxu0 0.0
      %422 = vmatpush1.msra.mxu0 0.0
      %423 = vmatprep.subr.mxu0 0.0
      %424 = vmatpush1.msra.mxu0 0.0
      %425 = vmatprep.subr.mxu0 0.0
      %426 = vmatpush1.msra.mxu0 0.0
      %427 = vmatprep.subr.mxu0 0.0
      %428 = vmatpush1.msra.mxu0 0.0
      %429 = vmatprep.subr.mxu0 0.0
      %430 = vmatpush1.msra.mxu0 0.0
      %431 = vmatprep.subr.mxu0 0.0
      %432 = vmatpush1.msra.mxu0 0.0
      %433 = vmatprep.subr.mxu0 0.0
      %434 = vmatpush1.msra.mxu0 0.0
      %435 = vmatprep.subr.mxu0 0.0
      %436 = vmatpush1.msra.mxu0 0.0
      %437 = vmatprep.subr.mxu0 0.0
      %438 = vmatpush1.msra.mxu0 0.0
      %439 = vmatprep.subr.mxu0 0.0
      %440 = vmatpush1.msra.mxu0 0.0
      %441 = vmatprep.subr.mxu0 0.0
      %442 = vmatpush1.msra.mxu0 0.0
      %443 = vmatprep.subr.mxu0 0.0
      %444 = vmatpush1.msra.mxu0 0.0
      %445 = vmatprep.subr.mxu0 0.0
      %446 = vmatpush1.msra.mxu0 0.0
      %447 = vmatprep.subr.mxu0 0.0
      %448 = vmatpush1.msra.mxu0 0.0
      %449 = vmatprep.subr.mxu0 0.0
      %450 = vmatpush1.msra.mxu0 0.0
      %451 = vmatprep.subr.mxu0 0.0
      %452 = vmatpush1.msra.mxu0 0.0
      %453 = vmatprep.subr.mxu0 0.0
      %454 = vmatpush1.msra.mxu0 0.0
      %455 = vmatprep.subr.mxu0 0.0
      %456 = vmatpush1.msra.mxu0 0.0
      %457 = vmatprep.subr.mxu0 0.0
      %458 = vmatpush1.msra.mxu0 0.0
      %459 = vmatprep.subr.mxu0 0.0
      %460 = vmatpush1.msra.mxu0 0.0
      %461 = vmatprep.mubr.f32.mxu0 0.0
      %462 = vmatmul.mubr.f32.gmra.mrb[0].mxu0 %v389
      %v463 = vpop.f32.mrb[0].mxu0
      %v464 = vadd.f32 %v384, %v463
      %v465 = vpop.f32.mrb[0].mxu0
      %v466 = vadd.f32 %v386, %v465
      %467 = vdwg.mxu0
      %468 = vrot.lane.b32.xlu0 %v254, 15
      %v469 = vpop.permute.xlu0 %468
      %470 = vrot.lane.b32.xlu0 %v256, 15
      %v471 = vpop.permute.xlu0 %470
      %vm472 = vcmp.lt.s32.totalorder %v263, 15
      %v473 = vsel %vm472, %v469, %v471
      %v474 = vsel %vm472, %v471, %v469
      %s475 = scalar_lea.vmem %s4, 4
      %v476 = vld [vmem:[%s475] sm:$0x3]
      %v478 = vlaneseq
      %v479 = vshrl.u32 %v478, 7
      %v480 = vsub.s32 0, %v479
      %v481 = vrot.slane %v476, %v480
      %v482 = vlaneseq
      %v483 = vshrl.u32 %v482, 7
      %v484 = vsub.s32 1, %v483
      %v485 = vrot.slane %v476, %v484
      %v488 = vmul.f32 %v474, %v481
      %v489 = vmul.f32 %v473, %v485
      %s490 = scalar_lea.vmem %s3, 16
      %v491 = vld [vmem:[%s490] sm:$0xff]
      %v493 = vsel %vm306, %v491, 0
      %v496 = vsel %vm310, %v488, 0
      %v499 = vsel %vm310, %v489, 0
      %501 = vmatprep.subr.mxu0 %v499
      %502 = vmatpush1.msra.mxu0 %v496
      %503 = vmatprep.subr.mxu0 0.0
      %504 = vmatpush1.msra.mxu0 0.0
      %505 = vmatprep.subr.mxu0 0.0
      %506 = vmatpush1.msra.mxu0 0.0
      %507 = vmatprep.subr.mxu0 0.0
      %508 = vmatpush1.msra.mxu0 0.0
      %509 = vmatprep.subr.mxu0 0.0
      %510 = vmatpush1.msra.mxu0 0.0
      %511 = vmatprep.subr.mxu0 0.0
      %512 = vmatpush1.msra.mxu0 0.0
      %513 = vmatprep.subr.mxu0 0.0
      %514 = vmatpush1.msra.mxu0 0.0
      %515 = vmatprep.subr.mxu0 0.0
      %516 = vmatpush1.msra.mxu0 0.0
      %517 = vmatprep.subr.mxu0 0.0
      %518 = vmatpush1.msra.mxu0 0.0
      %519 = vmatprep.subr.mxu0 0.0
      %520 = vmatpush1.msra.mxu0 0.0
      %521 = vmatprep.subr.mxu0 0.0
      %522 = vmatpush1.msra.mxu0 0.0
      %523 = vmatprep.subr.mxu0 0.0
      %524 = vmatpush1.msra.mxu0 0.0
      %525 = vmatprep.subr.mxu0 0.0
      %526 = vmatpush1.msra.mxu0 0.0
      %527 = vmatprep.subr.mxu0 0.0
      %528 = vmatpush1.msra.mxu0 0.0
      %529 = vmatprep.subr.mxu0 0.0
      %530 = vmatpush1.msra.mxu0 0.0
      %531 = vmatprep.subr.mxu0 0.0
      %532 = vmatpush1.msra.mxu0 0.0
      %533 = vmatprep.subr.mxu0 0.0
      %534 = vmatpush1.msra.mxu0 0.0
      %535 = vmatprep.subr.mxu0 0.0
      %536 = vmatpush1.msra.mxu0 0.0
      %537 = vmatprep.subr.mxu0 0.0
      %538 = vmatpush1.msra.mxu0 0.0
      %539 = vmatprep.subr.mxu0 0.0
      %540 = vmatpush1.msra.mxu0 0.0
      %541 = vmatprep.subr.mxu0 0.0
      %542 = vmatpush1.msra.mxu0 0.0
      %543 = vmatprep.subr.mxu0 0.0
      %544 = vmatpush1.msra.mxu0 0.0
      %545 = vmatprep.subr.mxu0 0.0
      %546 = vmatpush1.msra.mxu0 0.0
      %547 = vmatprep.subr.mxu0 0.0
      %548 = vmatpush1.msra.mxu0 0.0
      %549 = vmatprep.subr.mxu0 0.0
      %550 = vmatpush1.msra.mxu0 0.0
      %551 = vmatprep.subr.mxu0 0.0
      %552 = vmatpush1.msra.mxu0 0.0
      %553 = vmatprep.subr.mxu0 0.0
      %554 = vmatpush1.msra.mxu0 0.0
      %555 = vmatprep.subr.mxu0 0.0
      %556 = vmatpush1.msra.mxu0 0.0
      %557 = vmatprep.subr.mxu0 0.0
      %558 = vmatpush1.msra.mxu0 0.0
      %559 = vmatprep.subr.mxu0 0.0
      %560 = vmatpush1.msra.mxu0 0.0
      %561 = vmatprep.subr.mxu0 0.0
      %562 = vmatpush1.msra.mxu0 0.0
      %563 = vmatprep.subr.mxu0 0.0
      %564 = vmatpush1.msra.mxu0 0.0
      %565 = vmatprep.mubr.f32.mxu0 0.0
      %566 = vmatmul.mubr.f32.gmra.mrb[0].mxu0 %v493
      %v567 = vpop.f32.mrb[0].mxu0
      %v568 = vadd.f32 0.0, %v567
      %v569 = vpop.f32.mrb[0].mxu0
      %v570 = vadd.f32 0.0, %v569
      %571 = vdwg.mxu0
      %v572 = vadd.f32 %v464, %v568
      %v573 = vadd.f32 %v466, %v570
      %574 = vrot.lane.b32.xlu0 %v254, 1
      %v575 = vpop.permute.xlu0 %574
      %576 = vrot.lane.b32.xlu0 %v256, 1
      %v577 = vpop.permute.xlu0 %576
      %vm578 = vcmp.lt.s32.totalorder %v263, 1
      %v579 = vsel %vm578, %v575, %v577
      %v580 = vsel %vm578, %v577, %v575
      %s581 = scalar_lea.vmem %s4, 6
      %v582 = vld [vmem:[%s581] sm:$0x3]
      %v584 = vlaneseq
      %v585 = vshrl.u32 %v584, 7
      %v586 = vsub.s32 0, %v585
      %v587 = vrot.slane %v582, %v586
      %v588 = vlaneseq
      %v589 = vshrl.u32 %v588, 7
      %v590 = vsub.s32 1, %v589
      %v591 = vrot.slane %v582, %v590
      %v594 = vmul.f32 %v580, %v587
      %v595 = vmul.f32 %v579, %v591
      %s596 = scalar_lea.vmem %s3, 24
      %v597 = vld [vmem:[%s596] sm:$0xff]
      %v599 = vsel %vm306, %v597, 0
      %v602 = vsel %vm310, %v594, 0
      %v605 = vsel %vm310, %v595, 0
      %607 = vmatprep.subr.mxu0 %v605
      %608 = vmatpush1.msra.mxu0 %v602
      %609 = vmatprep.subr.mxu0 0.0
      %610 = vmatpush1.msra.mxu0 0.0
      %611 = vmatprep.subr.mxu0 0.0
      %612 = vmatpush1.msra.mxu0 0.0
      %613 = vmatprep.subr.mxu0 0.0
      %614 = vmatpush1.msra.mxu0 0.0
      %615 = vmatprep.subr.mxu0 0.0
      %616 = vmatpush1.msra.mxu0 0.0
      %617 = vmatprep.subr.mxu0 0.0
      %618 = vmatpush1.msra.mxu0 0.0
      %619 = vmatprep.subr.mxu0 0.0
      %620 = vmatpush1.msra.mxu0 0.0
      %621 = vmatprep.subr.mxu0 0.0
      %622 = vmatpush1.msra.mxu0 0.0
      %623 = vmatprep.subr.mxu0 0.0
      %624 = vmatpush1.msra.mxu0 0.0
      %625 = vmatprep.subr.mxu0 0.0
      %626 = vmatpush1.msra.mxu0 0.0
      %627 = vmatprep.subr.mxu0 0.0
      %628 = vmatpush1.msra.mxu0 0.0
      %629 = vmatprep.subr.mxu0 0.0
      %630 = vmatpush1.msra.mxu0 0.0
      %631 = vmatprep.subr.mxu0 0.0
      %632 = vmatpush1.msra.mxu0 0.0
      %633 = vmatprep.subr.mxu0 0.0
      %634 = vmatpush1.msra.mxu0 0.0
      %635 = vmatprep.subr.mxu0 0.0
      %636 = vmatpush1.msra.mxu0 0.0
      %637 = vmatprep.subr.mxu0 0.0
      %638 = vmatpush1.msra.mxu0 0.0
      %639 = vmatprep.subr.mxu0 0.0
      %640 = vmatpush1.msra.mxu0 0.0
      %641 = vmatprep.subr.mxu0 0.0
      %642 = vmatpush1.msra.mxu0 0.0
      %643 = vmatprep.subr.mxu0 0.0
      %644 = vmatpush1.msra.mxu0 0.0
      %645 = vmatprep.subr.mxu0 0.0
      %646 = vmatpush1.msra.mxu0 0.0
      %647 = vmatprep.subr.mxu0 0.0
      %648 = vmatpush1.msra.mxu0 0.0
      %649 = vmatprep.subr.mxu0 0.0
      %650 = vmatpush1.msra.mxu0 0.0
      %651 = vmatprep.subr.mxu0 0.0
      %652 = vmatpush1.msra.mxu0 0.0
      %653 = vmatprep.subr.mxu0 0.0
      %654 = vmatpush1.msra.mxu0 0.0
      %655 = vmatprep.subr.mxu0 0.0
      %656 = vmatpush1.msra.mxu0 0.0
      %657 = vmatprep.subr.mxu0 0.0
      %658 = vmatpush1.msra.mxu0 0.0
      %659 = vmatprep.subr.mxu0 0.0
      %660 = vmatpush1.msra.mxu0 0.0
      %661 = vmatprep.subr.mxu0 0.0
      %662 = vmatpush1.msra.mxu0 0.0
      %663 = vmatprep.subr.mxu0 0.0
      %664 = vmatpush1.msra.mxu0 0.0
      %665 = vmatprep.subr.mxu0 0.0
      %666 = vmatpush1.msra.mxu0 0.0
      %667 = vmatprep.subr.mxu0 0.0
      %668 = vmatpush1.msra.mxu0 0.0
      %669 = vmatprep.subr.mxu0 0.0
      %670 = vmatpush1.msra.mxu0 0.0
      %671 = vmatprep.mubr.f32.mxu0 0.0
      %672 = vmatmul.mubr.f32.gmra.mrb[0].mxu0 %v599
      %v673 = vpop.f32.mrb[0].mxu0
      %v674 = vadd.f32 0.0, %v673
      %v675 = vpop.f32.mrb[0].mxu0
      %v676 = vadd.f32 0.0, %v675
      %677 = vdwg.mxu0
      %v678 = vadd.f32 %v572, %v674
      %v679 = vadd.f32 %v573, %v676
      %s680 = scalar_lea.vmem %s3, 32
      %v681 = vld [vmem:[%s680] sm:$0xff]
      %v683 = vsel %vm306, %v681, 0
      %v685 = vsel %vm310, %v254, 0
      %v687 = vsel %vm310, %v256, 0
      %689 = vmatprep.subr.mxu0 %v687
      %690 = vmatpush1.msra.mxu0 %v685
      %691 = vmatprep.subr.mxu0 0.0
      %692 = vmatpush1.msra.mxu0 0.0
      %693 = vmatprep.subr.mxu0 0.0
      %694 = vmatpush1.msra.mxu0 0.0
      %695 = vmatprep.subr.mxu0 0.0
      %696 = vmatpush1.msra.mxu0 0.0
      %697 = vmatprep.subr.mxu0 0.0
      %698 = vmatpush1.msra.mxu0 0.0
      %699 = vmatprep.subr.mxu0 0.0
      %700 = vmatpush1.msra.mxu0 0.0
      %701 = vmatprep.subr.mxu0 0.0
      %702 = vmatpush1.msra.mxu0 0.0
      %703 = vmatprep.subr.mxu0 0.0
      %704 = vmatpush1.msra.mxu0 0.0
      %705 = vmatprep.subr.mxu0 0.0
      %706 = vmatpush1.msra.mxu0 0.0
      %707 = vmatprep.subr.mxu0 0.0
      %708 = vmatpush1.msra.mxu0 0.0
      %709 = vmatprep.subr.mxu0 0.0
      %710 = vmatpush1.msra.mxu0 0.0
      %711 = vmatprep.subr.mxu0 0.0
      %712 = vmatpush1.msra.mxu0 0.0
      %713 = vmatprep.subr.mxu0 0.0
      %714 = vmatpush1.msra.mxu0 0.0
      %715 = vmatprep.subr.mxu0 0.0
      %716 = vmatpush1.msra.mxu0 0.0
      %717 = vmatprep.subr.mxu0 0.0
      %718 = vmatpush1.msra.mxu0 0.0
      %719 = vmatprep.subr.mxu0 0.0
      %720 = vmatpush1.msra.mxu0 0.0
      %721 = vmatprep.subr.mxu0 0.0
      %722 = vmatpush1.msra.mxu0 0.0
      %723 = vmatprep.subr.mxu0 0.0
      %724 = vmatpush1.msra.mxu0 0.0
      %725 = vmatprep.subr.mxu0 0.0
      %726 = vmatpush1.msra.mxu0 0.0
      %727 = vmatprep.subr.mxu0 0.0
      %728 = vmatpush1.msra.mxu0 0.0
      %729 = vmatprep.subr.mxu0 0.0
      %730 = vmatpush1.msra.mxu0 0.0
      %731 = vmatprep.subr.mxu0 0.0
      %732 = vmatpush1.msra.mxu0 0.0
      %733 = vmatprep.subr.mxu0 0.0
      %734 = vmatpush1.msra.mxu0 0.0
      %735 = vmatprep.subr.mxu0 0.0
      %736 = vmatpush1.msra.mxu0 0.0
      %737 = vmatprep.subr.mxu0 0.0
      %738 = vmatpush1.msra.mxu0 0.0
      %739 = vmatprep.subr.mxu0 0.0
      %740 = vmatpush1.msra.mxu0 0.0
      %741 = vmatprep.subr.mxu0 0.0
      %742 = vmatpush1.msra.mxu0 0.0
      %743 = vmatprep.subr.mxu0 0.0
      %744 = vmatpush1.msra.mxu0 0.0
      %745 = vmatprep.subr.mxu0 0.0
      %746 = vmatpush1.msra.mxu0 0.0
      %747 = vmatprep.subr.mxu0 0.0
      %748 = vmatpush1.msra.mxu0 0.0
      %749 = vmatprep.subr.mxu0 0.0
      %750 = vmatpush1.msra.mxu0 0.0
      %751 = vmatprep.subr.mxu0 0.0
      %752 = vmatpush1.msra.mxu0 0.0
      %753 = vmatprep.mubr.f32.mxu0 0.0
      %754 = vmatmul.mubr.f32.gmra.mrb[0].mxu0 %v683
      %v755 = vpop.f32.mrb[0].mxu0
      %v756 = vadd.f32 0.0, %v755
      %v757 = vpop.f32.mrb[0].mxu0
      %v758 = vadd.f32 0.0, %v757
      %759 = vdwg.mxu0
      %v760 = vadd.f32 %v678, %v756
      %v761 = vadd.f32 %v679, %v758
      %762 = vrot.lane.b32.xlu0 %v254, 127
      %v763 = vpop.permute.xlu0 %762
      %764 = vrot.lane.b32.xlu0 %v256, 127
      %v765 = vpop.permute.xlu0 %764
      %vm766 = vcmp.lt.s32.totalorder %v263, 127
      %v767 = vsel %vm766, %v763, %v765
      %v768 = vsel %vm766, %v765, %v763
      %s769 = scalar_lea.vmem %s4, 10
      %v770 = vld [vmem:[%s769] sm:$0x3]
      %v772 = vlaneseq
      %v773 = vshrl.u32 %v772, 7
      %v774 = vsub.s32 0, %v773
      %v775 = vrot.slane %v770, %v774
      %v776 = vlaneseq
      %v777 = vshrl.u32 %v776, 7
      %v778 = vsub.s32 1, %v777
      %v779 = vrot.slane %v770, %v778
      %v782 = vmul.f32 %v767, %v775
      %v783 = vmul.f32 %v768, %v779
      %s784 = scalar_lea.vmem %s3, 40
      %v785 = vld [vmem:[%s784] sm:$0xff]
      %v787 = vsel %vm306, %v785, 0
      %v790 = vsel %vm310, %v782, 0
      %v793 = vsel %vm310, %v783, 0
      %795 = vmatprep.subr.mxu0 %v793
      %796 = vmatpush1.msra.mxu0 %v790
      %797 = vmatprep.subr.mxu0 0.0
      %798 = vmatpush1.msra.mxu0 0.0
      %799 = vmatprep.subr.mxu0 0.0
      %800 = vmatpush1.msra.mxu0 0.0
      %801 = vmatprep.subr.mxu0 0.0
      %802 = vmatpush1.msra.mxu0 0.0
      %803 = vmatprep.subr.mxu0 0.0
      %804 = vmatpush1.msra.mxu0 0.0
      %805 = vmatprep.subr.mxu0 0.0
      %806 = vmatpush1.msra.mxu0 0.0
      %807 = vmatprep.subr.mxu0 0.0
      %808 = vmatpush1.msra.mxu0 0.0
      %809 = vmatprep.subr.mxu0 0.0
      %810 = vmatpush1.msra.mxu0 0.0
      %811 = vmatprep.subr.mxu0 0.0
      %812 = vmatpush1.msra.mxu0 0.0
      %813 = vmatprep.subr.mxu0 0.0
      %814 = vmatpush1.msra.mxu0 0.0
      %815 = vmatprep.subr.mxu0 0.0
      %816 = vmatpush1.msra.mxu0 0.0
      %817 = vmatprep.subr.mxu0 0.0
      %818 = vmatpush1.msra.mxu0 0.0
      %819 = vmatprep.subr.mxu0 0.0
      %820 = vmatpush1.msra.mxu0 0.0
      %821 = vmatprep.subr.mxu0 0.0
      %822 = vmatpush1.msra.mxu0 0.0
      %823 = vmatprep.subr.mxu0 0.0
      %824 = vmatpush1.msra.mxu0 0.0
      %825 = vmatprep.subr.mxu0 0.0
      %826 = vmatpush1.msra.mxu0 0.0
      %827 = vmatprep.subr.mxu0 0.0
      %828 = vmatpush1.msra.mxu0 0.0
      %829 = vmatprep.subr.mxu0 0.0
      %830 = vmatpush1.msra.mxu0 0.0
      %831 = vmatprep.subr.mxu0 0.0
      %832 = vmatpush1.msra.mxu0 0.0
      %833 = vmatprep.subr.mxu0 0.0
      %834 = vmatpush1.msra.mxu0 0.0
      %835 = vmatprep.subr.mxu0 0.0
      %836 = vmatpush1.msra.mxu0 0.0
      %837 = vmatprep.subr.mxu0 0.0
      %838 = vmatpush1.msra.mxu0 0.0
      %839 = vmatprep.subr.mxu0 0.0
      %840 = vmatpush1.msra.mxu0 0.0
      %841 = vmatprep.subr.mxu0 0.0
      %842 = vmatpush1.msra.mxu0 0.0
      %843 = vmatprep.subr.mxu0 0.0
      %844 = vmatpush1.msra.mxu0 0.0
      %845 = vmatprep.subr.mxu0 0.0
      %846 = vmatpush1.msra.mxu0 0.0
      %847 = vmatprep.subr.mxu0 0.0
      %848 = vmatpush1.msra.mxu0 0.0
      %849 = vmatprep.subr.mxu0 0.0
      %850 = vmatpush1.msra.mxu0 0.0
      %851 = vmatprep.subr.mxu0 0.0
      %852 = vmatpush1.msra.mxu0 0.0
      %853 = vmatprep.subr.mxu0 0.0
      %854 = vmatpush1.msra.mxu0 0.0
      %855 = vmatprep.subr.mxu0 0.0
      %856 = vmatpush1.msra.mxu0 0.0
      %857 = vmatprep.subr.mxu0 0.0
      %858 = vmatpush1.msra.mxu0 0.0
      %859 = vmatprep.mubr.f32.mxu0 0.0
      %860 = vmatmul.mubr.f32.gmra.mrb[0].mxu0 %v787
      %v861 = vpop.f32.mrb[0].mxu0
      %v862 = vadd.f32 0.0, %v861
      %v863 = vpop.f32.mrb[0].mxu0
      %v864 = vadd.f32 0.0, %v863
      %865 = vdwg.mxu0
      %v866 = vadd.f32 %v760, %v862
      %v867 = vadd.f32 %v761, %v864
      %868 = vrot.lane.b32.xlu0 %v254, 113
      %v869 = vpop.permute.xlu0 %868
      %870 = vrot.lane.b32.xlu0 %v256, 113
      %v871 = vpop.permute.xlu0 %870
      %vm872 = vcmp.lt.s32.totalorder %v263, 113
      %v873 = vsel %vm872, %v869, %v871
      %v874 = vsel %vm872, %v871, %v869
      %s875 = scalar_lea.vmem %s4, 12
      %v876 = vld [vmem:[%s875] sm:$0x3]
      %v878 = vlaneseq
      %v879 = vshrl.u32 %v878, 7
      %v880 = vsub.s32 0, %v879
      %v881 = vrot.slane %v876, %v880
      %v882 = vlaneseq
      %v883 = vshrl.u32 %v882, 7
      %v884 = vsub.s32 1, %v883
      %v885 = vrot.slane %v876, %v884
      %v888 = vmul.f32 %v873, %v881
      %v889 = vmul.f32 %v874, %v885
      %s890 = scalar_lea.vmem %s3, 48
      %v891 = vld [vmem:[%s890] sm:$0xff]
      %v893 = vsel %vm306, %v891, 0
      %v896 = vsel %vm310, %v888, 0
      %v899 = vsel %vm310, %v889, 0
      %901 = vmatprep.subr.mxu0 %v899
      %902 = vmatpush1.msra.mxu0 %v896
      %903 = vmatprep.subr.mxu0 0.0
      %904 = vmatpush1.msra.mxu0 0.0
      %905 = vmatprep.subr.mxu0 0.0
      %906 = vmatpush1.msra.mxu0 0.0
      %907 = vmatprep.subr.mxu0 0.0
      %908 = vmatpush1.msra.mxu0 0.0
      %909 = vmatprep.subr.mxu0 0.0
      %910 = vmatpush1.msra.mxu0 0.0
      %911 = vmatprep.subr.mxu0 0.0
      %912 = vmatpush1.msra.mxu0 0.0
      %913 = vmatprep.subr.mxu0 0.0
      %914 = vmatpush1.msra.mxu0 0.0
      %915 = vmatprep.subr.mxu0 0.0
      %916 = vmatpush1.msra.mxu0 0.0
      %917 = vmatprep.subr.mxu0 0.0
      %918 = vmatpush1.msra.mxu0 0.0
      %919 = vmatprep.subr.mxu0 0.0
      %920 = vmatpush1.msra.mxu0 0.0
      %921 = vmatprep.subr.mxu0 0.0
      %922 = vmatpush1.msra.mxu0 0.0
      %923 = vmatprep.subr.mxu0 0.0
      %924 = vmatpush1.msra.mxu0 0.0
      %925 = vmatprep.subr.mxu0 0.0
      %926 = vmatpush1.msra.mxu0 0.0
      %927 = vmatprep.subr.mxu0 0.0
      %928 = vmatpush1.msra.mxu0 0.0
      %929 = vmatprep.subr.mxu0 0.0
      %930 = vmatpush1.msra.mxu0 0.0
      %931 = vmatprep.subr.mxu0 0.0
      %932 = vmatpush1.msra.mxu0 0.0
      %933 = vmatprep.subr.mxu0 0.0
      %934 = vmatpush1.msra.mxu0 0.0
      %935 = vmatprep.subr.mxu0 0.0
      %936 = vmatpush1.msra.mxu0 0.0
      %937 = vmatprep.subr.mxu0 0.0
      %938 = vmatpush1.msra.mxu0 0.0
      %939 = vmatprep.subr.mxu0 0.0
      %940 = vmatpush1.msra.mxu0 0.0
      %941 = vmatprep.subr.mxu0 0.0
      %942 = vmatpush1.msra.mxu0 0.0
      %943 = vmatprep.subr.mxu0 0.0
      %944 = vmatpush1.msra.mxu0 0.0
      %945 = vmatprep.subr.mxu0 0.0
      %946 = vmatpush1.msra.mxu0 0.0
      %947 = vmatprep.subr.mxu0 0.0
      %948 = vmatpush1.msra.mxu0 0.0
      %949 = vmatprep.subr.mxu0 0.0
      %950 = vmatpush1.msra.mxu0 0.0
      %951 = vmatprep.subr.mxu0 0.0
      %952 = vmatpush1.msra.mxu0 0.0
      %953 = vmatprep.subr.mxu0 0.0
      %954 = vmatpush1.msra.mxu0 0.0
      %955 = vmatprep.subr.mxu0 0.0
      %956 = vmatpush1.msra.mxu0 0.0
      %957 = vmatprep.subr.mxu0 0.0
      %958 = vmatpush1.msra.mxu0 0.0
      %959 = vmatprep.subr.mxu0 0.0
      %960 = vmatpush1.msra.mxu0 0.0
      %961 = vmatprep.subr.mxu0 0.0
      %962 = vmatpush1.msra.mxu0 0.0
      %963 = vmatprep.subr.mxu0 0.0
      %964 = vmatpush1.msra.mxu0 0.0
      %965 = vmatprep.mubr.f32.mxu0 0.0
      %966 = vmatmul.mubr.f32.gmra.mrb[0].mxu0 %v893
      %v967 = vpop.f32.mrb[0].mxu0
      %v968 = vadd.f32 0.0, %v967
      %v969 = vpop.f32.mrb[0].mxu0
      %v970 = vadd.f32 0.0, %v969
      %971 = vdwg.mxu0
      %v972 = vadd.f32 %v866, %v968
      %v973 = vadd.f32 %v867, %v970
      %974 = vrot.lane.b32.xlu0 %v254, 112
      %v975 = vpop.permute.xlu0 %974
      %976 = vrot.lane.b32.xlu0 %v256, 112
      %v977 = vpop.permute.xlu0 %976
      %vm978 = vcmp.lt.s32.totalorder %v263, 112
      %v979 = vsel %vm978, %v975, %v977
      %v980 = vsel %vm978, %v977, %v975
      %s981 = scalar_lea.vmem %s4, 14
      %v982 = vld [vmem:[%s981] sm:$0x3]
      %v984 = vlaneseq
      %v985 = vshrl.u32 %v984, 7
      %v986 = vsub.s32 0, %v985
      %v987 = vrot.slane %v982, %v986
      %v988 = vlaneseq
      %v989 = vshrl.u32 %v988, 7
      %v990 = vsub.s32 1, %v989
      %v991 = vrot.slane %v982, %v990
      %v994 = vmul.f32 %v979, %v987
      %v995 = vmul.f32 %v980, %v991
      %s996 = scalar_lea.vmem %s3, 56
      %v997 = vld [vmem:[%s996] sm:$0xff]
      %v999 = vsel %vm306, %v997, 0
      %v1002 = vsel %vm310, %v994, 0
      %v1005 = vsel %vm310, %v995, 0
      %1007 = vmatprep.subr.mxu0 %v1005
      %1008 = vmatpush1.msra.mxu0 %v1002
      %1009 = vmatprep.subr.mxu0 0.0
      %1010 = vmatpush1.msra.mxu0 0.0
      %1011 = vmatprep.subr.mxu0 0.0
      %1012 = vmatpush1.msra.mxu0 0.0
      %1013 = vmatprep.subr.mxu0 0.0
      %1014 = vmatpush1.msra.mxu0 0.0
      %1015 = vmatprep.subr.mxu0 0.0
      %1016 = vmatpush1.msra.mxu0 0.0
      %1017 = vmatprep.subr.mxu0 0.0
      %1018 = vmatpush1.msra.mxu0 0.0
      %1019 = vmatprep.subr.mxu0 0.0
      %1020 = vmatpush1.msra.mxu0 0.0
      %1021 = vmatprep.subr.mxu0 0.0
      %1022 = vmatpush1.msra.mxu0 0.0
      %1023 = vmatprep.subr.mxu0 0.0
      %1024 = vmatpush1.msra.mxu0 0.0
      %1025 = vmatprep.subr.mxu0 0.0
      %1026 = vmatpush1.msra.mxu0 0.0
      %1027 = vmatprep.subr.mxu0 0.0
      %1028 = vmatpush1.msra.mxu0 0.0
      %1029 = vmatprep.subr.mxu0 0.0
      %1030 = vmatpush1.msra.mxu0 0.0
      %1031 = vmatprep.subr.mxu0 0.0
      %1032 = vmatpush1.msra.mxu0 0.0
      %1033 = vmatprep.subr.mxu0 0.0
      %1034 = vmatpush1.msra.mxu0 0.0
      %1035 = vmatprep.subr.mxu0 0.0
      %1036 = vmatpush1.msra.mxu0 0.0
      %1037 = vmatprep.subr.mxu0 0.0
      %1038 = vmatpush1.msra.mxu0 0.0
      %1039 = vmatprep.subr.mxu0 0.0
      %1040 = vmatpush1.msra.mxu0 0.0
      %1041 = vmatprep.subr.mxu0 0.0
      %1042 = vmatpush1.msra.mxu0 0.0
      %1043 = vmatprep.subr.mxu0 0.0
      %1044 = vmatpush1.msra.mxu0 0.0
      %1045 = vmatprep.subr.mxu0 0.0
      %1046 = vmatpush1.msra.mxu0 0.0
      %1047 = vmatprep.subr.mxu0 0.0
      %1048 = vmatpush1.msra.mxu0 0.0
      %1049 = vmatprep.subr.mxu0 0.0
      %1050 = vmatpush1.msra.mxu0 0.0
      %1051 = vmatprep.subr.mxu0 0.0
      %1052 = vmatpush1.msra.mxu0 0.0
      %1053 = vmatprep.subr.mxu0 0.0
      %1054 = vmatpush1.msra.mxu0 0.0
      %1055 = vmatprep.subr.mxu0 0.0
      %1056 = vmatpush1.msra.mxu0 0.0
      %1057 = vmatprep.subr.mxu0 0.0
      %1058 = vmatpush1.msra.mxu0 0.0
      %1059 = vmatprep.subr.mxu0 0.0
      %1060 = vmatpush1.msra.mxu0 0.0
      %1061 = vmatprep.subr.mxu0 0.0
      %1062 = vmatpush1.msra.mxu0 0.0
      %1063 = vmatprep.subr.mxu0 0.0
      %1064 = vmatpush1.msra.mxu0 0.0
      %1065 = vmatprep.subr.mxu0 0.0
      %1066 = vmatpush1.msra.mxu0 0.0
      %1067 = vmatprep.subr.mxu0 0.0
      %1068 = vmatpush1.msra.mxu0 0.0
      %1069 = vmatprep.subr.mxu0 0.0
      %1070 = vmatpush1.msra.mxu0 0.0
      %1071 = vmatprep.mubr.f32.mxu0 0.0
      %1072 = vmatmul.mubr.f32.gmra.mrb[0].mxu0 %v999
      %v1073 = vpop.f32.mrb[0].mxu0
      %v1074 = vadd.f32 0.0, %v1073
      %v1075 = vpop.f32.mrb[0].mxu0
      %v1076 = vadd.f32 0.0, %v1075
      %1077 = vdwg.mxu0
      %v1078 = vadd.f32 %v972, %v1074
      %v1079 = vadd.f32 %v973, %v1076
      %1080 = vrot.lane.b32.xlu0 %v254, 111
      %v1081 = vpop.permute.xlu0 %1080
      %1082 = vrot.lane.b32.xlu0 %v256, 111
      %v1083 = vpop.permute.xlu0 %1082
      %vm1084 = vcmp.lt.s32.totalorder %v263, 111
      %v1085 = vsel %vm1084, %v1081, %v1083
      %v1086 = vsel %vm1084, %v1083, %v1081
      %s1087 = scalar_lea.vmem %s4, 16
      %v1088 = vld [vmem:[%s1087] sm:$0x3]
      %v1090 = vlaneseq
      %v1091 = vshrl.u32 %v1090, 7
      %v1092 = vsub.s32 0, %v1091
      %v1093 = vrot.slane %v1088, %v1092
      %v1094 = vlaneseq
      %v1095 = vshrl.u32 %v1094, 7
      %v1096 = vsub.s32 1, %v1095
      %v1097 = vrot.slane %v1088, %v1096
      %v1100 = vmul.f32 %v1085, %v1093
      %v1101 = vmul.f32 %v1086, %v1097
      %s1102 = scalar_lea.vmem %s3, 64
      %v1103 = vld [vmem:[%s1102] sm:$0xff]
      %v1105 = vsel %vm306, %v1103, 0
      %v1108 = vsel %vm310, %v1100, 0
      %v1111 = vsel %vm310, %v1101, 0
      %1113 = vmatprep.subr.mxu0 %v1111
      %1114 = vmatpush1.msra.mxu0 %v1108
      %1115 = vmatprep.subr.mxu0 0.0
      %1116 = vmatpush1.msra.mxu0 0.0
      %1117 = vmatprep.subr.mxu0 0.0
      %1118 = vmatpush1.msra.mxu0 0.0
      %1119 = vmatprep.subr.mxu0 0.0
      %1120 = vmatpush1.msra.mxu0 0.0
      %1121 = vmatprep.subr.mxu0 0.0
      %1122 = vmatpush1.msra.mxu0 0.0
      %1123 = vmatprep.subr.mxu0 0.0
      %1124 = vmatpush1.msra.mxu0 0.0
      %1125 = vmatprep.subr.mxu0 0.0
      %1126 = vmatpush1.msra.mxu0 0.0
      %1127 = vmatprep.subr.mxu0 0.0
      %1128 = vmatpush1.msra.mxu0 0.0
      %1129 = vmatprep.subr.mxu0 0.0
      %1130 = vmatpush1.msra.mxu0 0.0
      %1131 = vmatprep.subr.mxu0 0.0
      %1132 = vmatpush1.msra.mxu0 0.0
      %1133 = vmatprep.subr.mxu0 0.0
      %1134 = vmatpush1.msra.mxu0 0.0
      %1135 = vmatprep.subr.mxu0 0.0
      %1136 = vmatpush1.msra.mxu0 0.0
      %1137 = vmatprep.subr.mxu0 0.0
      %1138 = vmatpush1.msra.mxu0 0.0
      %1139 = vmatprep.subr.mxu0 0.0
      %1140 = vmatpush1.msra.mxu0 0.0
      %1141 = vmatprep.subr.mxu0 0.0
      %1142 = vmatpush1.msra.mxu0 0.0
      %1143 = vmatprep.subr.mxu0 0.0
      %1144 = vmatpush1.msra.mxu0 0.0
      %1145 = vmatprep.subr.mxu0 0.0
      %1146 = vmatpush1.msra.mxu0 0.0
      %1147 = vmatprep.subr.mxu0 0.0
      %1148 = vmatpush1.msra.mxu0 0.0
      %1149 = vmatprep.subr.mxu0 0.0
      %1150 = vmatpush1.msra.mxu0 0.0
      %1151 = vmatprep.subr.mxu0 0.0
      %1152 = vmatpush1.msra.mxu0 0.0
      %1153 = vmatprep.subr.mxu0 0.0
      %1154 = vmatpush1.msra.mxu0 0.0
      %1155 = vmatprep.subr.mxu0 0.0
      %1156 = vmatpush1.msra.mxu0 0.0
      %1157 = vmatprep.subr.mxu0 0.0
      %1158 = vmatpush1.msra.mxu0 0.0
      %1159 = vmatprep.subr.mxu0 0.0
      %1160 = vmatpush1.msra.mxu0 0.0
      %1161 = vmatprep.subr.mxu0 0.0
      %1162 = vmatpush1.msra.mxu0 0.0
      %1163 = vmatprep.subr.mxu0 0.0
      %1164 = vmatpush1.msra.mxu0 0.0
      %1165 = vmatprep.subr.mxu0 0.0
      %1166 = vmatpush1.msra.mxu0 0.0
      %1167 = vmatprep.subr.mxu0 0.0
      %1168 = vmatpush1.msra.mxu0 0.0
      %1169 = vmatprep.subr.mxu0 0.0
      %1170 = vmatpush1.msra.mxu0 0.0
      %1171 = vmatprep.subr.mxu0 0.0
      %1172 = vmatpush1.msra.mxu0 0.0
      %1173 = vmatprep.subr.mxu0 0.0
      %1174 = vmatpush1.msra.mxu0 0.0
      %1175 = vmatprep.subr.mxu0 0.0
      %1176 = vmatpush1.msra.mxu0 0.0
      %1177 = vmatprep.mubr.f32.mxu0 0.0
      %1178 = vmatmul.mubr.f32.gmra.mrb[0].mxu0 %v1105
      %v1179 = vpop.f32.mrb[0].mxu0
      %v1180 = vadd.f32 0.0, %v1179
      %v1181 = vpop.f32.mrb[0].mxu0
      %v1182 = vadd.f32 0.0, %v1181
      %1183 = vdwg.mxu0
      %v1184 = vadd.f32 %v1078, %v1180
      %v1185 = vadd.f32 %v1079, %v1182
      %1186 = vst [vmem:[%s224] sm:$0xff] %v1184
      %1187 = vst [vmem:[%s224 + $0x8] sm:$0xff] %v1185
      %p1188 = scmp.lt.s32.totalorder %s16, 1
      %s1189 = scalar_select %p1188, %s16, 1
      %s1190 = smul.addr %s1189, 2
      %s1191 = smul.addr %s1190, 8
      %s1192 = scalar_lea.vmem %s5, %s1191
      // Predicated region
      $region41: #{dense_layer.1} parent=39 // pred_check
        %p1193 = pneg %p144
      $region42: #{dense_layer.1} parent=39 // pred_check_branch
        %1195 = sbr.rel (%p1193) target = $region44
      $region43: #{dense_layer.1} parent=39 // pred_region
        _
      $region44: #{dense_layer.1} parent=39 // pred_fallthru
        _
    $region40: #{dense_layer.1} parent=5 // pred_fallthru
      _
    %p1196 = scmp.le.s32.totalorder 2, %s11
    // Predicated region
    $region45: #{dense_layer.1} parent=5 // pred_check
      %p1197 = pneg %p1196
    $region46: #{dense_layer.1} parent=5 // pred_check_branch
      %1199 = sbr.rel (%p1197) target = $region48
    $region47: #{dense_layer.1} parent=5 // pred_region
      %s1200 = ssub.s32 %s11, 2
      // Predicated region
      $region49: #{dense_layer.1} parent=47 // pred_check
        %p1201 = pneg %p150
      $region50: #{dense_layer.1} parent=47 // pred_check_branch
        %1203 = sbr.rel (%p1201) target = $region52
      $region51: #{dense_layer.1} parent=47 // pred_region
        %p1204 = scmp.lt.s32.totalorder %s17, 1
        %s1205 = scalar_select %p1204, %s17, 1
        %s1206 = smul.addr %s1205, 2
        %s1207 = smul.addr %s1206, 8
        %s1208 = scalar_lea.vmem %s5, %s1207
      $region52: #{dense_layer.1} parent=47 // pred_fallthru
        _
    $region48: #{dense_layer.1} parent=5 // pred_fallthru
      _
  $region6: #{dense_layer.1} parent=0 // loop_footer
    %s15 = sadd.s32 1, %s11
  $region7: #{dense_layer.1} parent=0 // loop_footer_branch
    %10 = sbr.rel target = $region3
  $region8: #{dense_layer.1} parent=0 // loop_exit
    _

</llo_original>
